<compile_context>
chip_gen: v5e
topology: v5e:2x2
jax: 0.10.0
libtpu: 0.0.40
codegen_flags: <defaults>
</compile_context>

<pallas_src>
import functools
import math

import jax
import jax.numpy as jnp
from jax.experimental import pallas as pl
from jax.experimental.pallas import tpu as pltpu

LANES = 512  # large multiple of 128 -> lane-dense, unmasked vector stores


def _diffractive_relu_kernel(x_ref, o_ref, *, alpha: float):
    x = x_ref[...]
    a = jnp.asarray(alpha, x.dtype)
    # Keep the true division by alpha so the "zero exactly at the fp boundary"
    # behaviour matches PyTorch's rounding bit-for-bit (no reciprocal trick).
    m = jnp.maximum(jnp.abs(x), a) / a - jnp.asarray(1.0, x.dtype)
    # m == 0 exactly where the original m/m -> NaN -> nan_to_num -> 0 path zeroes x.
    o_ref[...] = jnp.where(m != jnp.asarray(0.0, x.dtype), x, jnp.zeros_like(x))


def diffractive_relu(x: jax.Array, alpha: float) -> jax.Array:
    """Applies DiffractiveReLU elementwise. Accepts any shape (e.g. NCHW)."""
    orig_shape = x.shape
    total = math.prod(orig_shape)
    itemsize = jnp.dtype(x.dtype).itemsize

    # Minimal padding: round the flat length up to an (8 sublane x 512 lane) tile.
    rows_needed = pl.cdiv(total, LANES)
    padded_rows = max(8, ((rows_needed + 7) // 8) * 8)
    padded_total = padded_rows * LANES

    # ~2 MiB input block (matching 2 MiB output block; both double-buffered
    # -> ~8 MiB VMEM, under every chip's default scoped limit).
    target_block_bytes = 2 * 1024 * 1024
    block_rows = max(8, (target_block_bytes // (LANES * itemsize)) // 8 * 8)
    # Shrink (never below 8 sublane-aligned rows) if that keeps the grid at
    # >= 8 steps: keeps both v7x TensorCores fed and the DMA pipeline primed.
    while block_rows > 8 and pl.cdiv(padded_rows, block_rows) < 8:
        block_rows //= 2
    block_rows = max(8, (block_rows // 8) * 8)
    block_rows = min(block_rows, padded_rows)

    grid_rows = pl.cdiv(padded_rows, block_rows)  # ragged tail block is OK

    flat = x.reshape(-1)
    if padded_total != total:
        # Pad with zeros (maps to output 0); sliced off after the kernel.
        flat = jnp.pad(flat, (0, padded_total - total))
    x2 = flat.reshape(padded_rows, LANES)

    kernel = functools.partial(_diffractive_relu_kernel, alpha=float(alpha))

    out2 = pl.pallas_call(
        kernel,
        out_shape=jax.ShapeDtypeStruct((padded_rows, LANES), x2.dtype),
        grid=(grid_rows,),
        in_specs=[pl.BlockSpec((block_rows, LANES), lambda i: (i, 0))],
        out_specs=pl.BlockSpec((block_rows, LANES), lambda i: (i, 0)),
        compiler_params=pltpu.CompilerParams(
            dimension_semantics=("parallel",)),
    )(x2)

    out_flat = out2.reshape(-1)
    if padded_total != total:
        out_flat = out_flat[:total]
    return out_flat.reshape(orig_shape)


def _reference(x: jnp.ndarray, alpha: float) -> jnp.ndarray:
    # Plain-JAX reference mirroring the PyTorch code line by line.
    m = jnp.maximum(jnp.abs(x), alpha)          # torch.clamp(|x|, min=alpha)
    m = m / alpha - 1.0
    r = jnp.nan_to_num(m / m)                   # NaN (0/0) -> 0, else 1
    return x * r


if __name__ == "__main__":
    alpha = 0.5
    key = jax.random.PRNGKey(0)
    # NCHW input, small shape.
    x = jax.random.normal(key, (2, 4, 16, 16), dtype=jnp.float32)
    # Exercise the exact-boundary zeroing path explicitly.
    x = x.at[0, 0, 0, 0].set(alpha)
    x = x.at[0, 0, 0, 1].set(-alpha)
    x = x.at[0, 0, 0, 2].set(alpha * 1.0000001)
    x = x.at[0, 0, 0, 3].set(0.0)

    out = diffractive_relu(x, alpha)
    out = jax.block_until_ready(out)

    ref = _reference(x, alpha)
    assert out.shape == x.shape and out.dtype == x.dtype
    assert jnp.allclose(out, ref, atol=0.0, rtol=0.0), "mismatch vs reference"

    print("KERNEL_OK")
</pallas_src>

<mosaic_0001>
module attributes {stable_mosaic.version = 11 : i64} {
  func.func @_diffractive_relu_kernel(%arg0: i32, %arg1: memref<8x512xf32, #tpu.memory_space<vmem>>, %arg2: memref<8x512xf32, #tpu.memory_space<vmem>>) attributes {dimension_semantics = [#tpu.dimension_semantics<parallel>], iteration_bounds = array<i64: 1>, scalar_prefetch = 0 : i64, scratch_operands = 0 : i64, tpu.core_type = #tpu.core_type<tc>, window_params = [{transform_indices = @transform_0, window_bounds = array<i64: 8, 512>}, {transform_indices = @transform_1, window_bounds = array<i64: 8, 512>}]} {
    %c0 = arith.constant 0 : index
    %c0_0 = arith.constant 0 : index
    %0 = vector.load %arg1[%c0, %c0_0] : memref<8x512xf32, #tpu.memory_space<vmem>>, vector<8x512xf32>
    %1 = math.absf %0 : vector<8x512xf32>
    %cst = arith.constant 5.000000e-01 : f32
    %2 = vector.broadcast %cst : f32 to vector<8x512xf32>
    %3 = arith.maximumf %1, %2 : vector<8x512xf32>
    %cst_1 = arith.constant 5.000000e-01 : f32
    %4 = vector.broadcast %cst_1 : f32 to vector<8x512xf32>
    %5 = arith.divf %3, %4 : vector<8x512xf32>
    %cst_2 = arith.constant 1.000000e+00 : f32
    %6 = vector.broadcast %cst_2 : f32 to vector<8x512xf32>
    %7 = arith.subf %5, %6 : vector<8x512xf32>
    %cst_3 = arith.constant 0.000000e+00 : f32
    %8 = vector.broadcast %cst_3 : f32 to vector<8x512xf32>
    %9 = arith.cmpf one, %7, %8 : vector<8x512xf32>
    %cst_4 = arith.constant 0.000000e+00 : f32
    %10 = vector.broadcast %cst_4 : f32 to vector<8x512xf32>
    %11 = arith.select %9, %0, %10 : vector<8x512xi1>, vector<8x512xf32>
    %c0_5 = arith.constant 0 : index
    %c0_6 = arith.constant 0 : index
    %12 = vector.load %arg2[%c0_5, %c0_6] : memref<8x512xf32, #tpu.memory_space<vmem>>, vector<8x512xf32>
    tpu.vector_store %arg2[%c0_5, %c0_6], %11 {strides = array<i32>} : memref<8x512xf32, #tpu.memory_space<vmem>>, vector<8x512xf32>,
    return
  }
  func.func @transform_0(%arg0: i32) -> (i32, i32) {
    %c0_i32 = arith.constant 0 : i32
    %c0_i32_0 = arith.constant 0 : i32
    return %arg0, %c0_i32 : i32, i32
  }
  func.func @transform_1(%arg0: i32) -> (i32, i32) {
    %c0_i32 = arith.constant 0 : i32
    %c0_i32_0 = arith.constant 0 : i32
    return %arg0, %c0_i32 : i32, i32
  }
}

</mosaic_0001>

<llo_original>
// kernel: tpu_custom_call.1
$region0: #{tpu_custom_call.1}
  #allocation0 [shape = 'u32[]', space=smem, size = 0x4, offset = 0x4, fixed_abs, tag = 'smem constant byte address 0x4 - core index']
  #allocation1 [shape = 'u32[72,128]{1,0:T(1,128)}', space=vmem, size = 0x9000, scoped, tag = 'internal scratch']
  %s0 = inlined_call_operand.hbm [shape: f32[8,512], index: 0, kind: input, shape index: {}]
  %s1 = inlined_call_operand.hbm [shape: f32[8,512], index: 1, kind: output, shape index: {}]
  %s2 = sld [smem:[#allocation0]]
  $region18: #{tpu_custom_call.1} parent=0
    _
  %s4 = ssub.s32 1, %s2
  %s5 = scalar_select 0, %s4, %s2
  $region1: #{tpu_custom_call.1} parent=0
    #allocation2 [shape = 'u8[16384]{0}', space=vmem, size = 0x4000, scoped, tag = 'input window, operand 0, single buffered']
    #allocation3 [shape = 's32[1]{0}', space=sflag, size = 0x4, scoped, tag = 'scoped memory for tpu_custom_call.1']
    #allocation4 [shape = 's32[1]{0}', space=sflag, size = 0x4, scoped, tag = 'scoped memory for tpu_custom_call.1']
    #allocation5 [shape = 'u8[16384]{0}', space=vmem, size = 0x4000, scoped, tag = 'output window, operand 0, single buffered']
    %6 = vsyncpa [#allocation3], 0
    %7 = vsyncpa [#allocation4], 0
    // Predicated region
    $region2: #{tpu_custom_call.1} parent=1 // pred_check
      _
    $region3: #{tpu_custom_call.1} parent=1 // pred_check_branch
      %9 = sbr.rel (0) target = $region5
    $region4: #{tpu_custom_call.1} parent=1 // pred_region
      %11 = vsyncadd [#allocation3], 0
      %s13 = sshll.u32 %s0, 4
      %s14 = int_to_ptr.hbm [resolvable:$true] %s13
      %s15 = sshll.u32 [#allocation2], 4
      %s16 = int_to_ptr.vmem [resolvable:$true] %s15
      %18 = dma.hbm_to_vmem [thread:$0]  %s14, 512, %s16, [#allocation3]
    $region5: #{tpu_custom_call.1} parent=1 // pred_fallthru
      _
    // Predicated region
    $region6: #{tpu_custom_call.1} parent=1 // pred_check
      _
    $region7: #{tpu_custom_call.1} parent=1 // pred_check_branch
      %20 = sbr.rel (0) target = $region9
    $region8: #{tpu_custom_call.1} parent=1 // pred_region
      %22 = dma.done [#allocation3], 512
    $region9: #{tpu_custom_call.1} parent=1 // pred_fallthru
      _
    %v23 = vld [vmem:[#allocation2] sm:$0xff]
    %v24 = vld [vmem:[#allocation2 + $0x8] sm:$0xff]
    %v25 = vld [vmem:[#allocation2 + $0x10] sm:$0xff]
    %v26 = vld [vmem:[#allocation2 + $0x18] sm:$0xff]
    %v27 = vand.u32 2147483647, %v23
    %v28 = vand.u32 2147483647, %v24
    %v29 = vand.u32 2147483647, %v25
    %v30 = vand.u32 2147483647, %v26
    %v31 = vmax.f32 %v27, 0.5
    %v32 = vmax.f32 %v28, 0.5
    %v33 = vmax.f32 %v29, 0.5
    %v34 = vmax.f32 %v30, 0.5
    %v35 = vrcp.pop 0.5
    %v36 = vmul.f32 0.5, %v35
    %v37 = vsub.f32 1.0, %v36
    %v38 = vmul.f32 %v35, %v37
    %v39 = vadd.f32 %v35, %v38
    %vm40 = vweird.f32 %v35
    %v41 = vsel %vm40, %v35, %v39
    %v42 = vmul.f32 %v31, %v41
    %v43 = vmul.f32 %v32, %v41
    %v44 = vmul.f32 %v33, %v41
    %v45 = vmul.f32 %v34, %v41
    %v46 = vsub.f32 %v42, 1.0
    %v47 = vsub.f32 %v43, 1.0
    %v48 = vsub.f32 %v44, 1.0
    %v49 = vsub.f32 %v45, 1.0
    %vm50 = vcmp.ne.f32.partialorder %v46, 0.0
    %vm51 = vcmp.ne.f32.partialorder %v47, 0.0
    %vm52 = vcmp.ne.f32.partialorder %v48, 0.0
    %vm53 = vcmp.ne.f32.partialorder %v49, 0.0
    %v54 = vsel %vm50, %v23, 0.0
    %v55 = vsel %vm51, %v24, 0.0
    %v56 = vsel %vm52, %v25, 0.0
    %v57 = vsel %vm53, %v26, 0.0
    %58 = vst [vmem:[#allocation5] sm:$0xff] %v54
    %59 = vst [vmem:[#allocation5 + $0x8] sm:$0xff] %v55
    %60 = vst [vmem:[#allocation5 + $0x10] sm:$0xff] %v56
    %61 = vst [vmem:[#allocation5 + $0x18] sm:$0xff] %v57
    // Predicated region
    $region10: #{tpu_custom_call.1} parent=1 // pred_check
      _
    $region11: #{tpu_custom_call.1} parent=1 // pred_check_branch
      %63 = sbr.rel (0) target = $region13
    $region12: #{tpu_custom_call.1} parent=1 // pred_region
      %65 = vsyncadd [#allocation4], 0
      %s67 = sshll.u32 [#allocation5], 4
      %s68 = int_to_ptr.vmem [resolvable:$true] %s67
      %s69 = sshll.u32 %s1, 4
      %s70 = int_to_ptr.hbm [resolvable:$true] %s69
      %72 = dma.vmem_to_hbm [thread:$0]  %s68, 512, %s70, [#allocation4]
    $region13: #{tpu_custom_call.1} parent=1 // pred_fallthru
      _
    // Predicated region
    $region14: #{tpu_custom_call.1} parent=1 // pred_check
      _
    $region15: #{tpu_custom_call.1} parent=1 // pred_check_branch
      %74 = sbr.rel (0) target = $region17
    $region16: #{tpu_custom_call.1} parent=1 // pred_region
      %76 = dma.done [#allocation4], 512
    $region17: #{tpu_custom_call.1} parent=1 // pred_fallthru
      _
    %77 = vsyncpa [#allocation3], 1
    %78 = vsyncpa [#allocation4], 1

</llo_original>
